<compile_context>
chip_gen: v7x
topology: tpu7x:2x2x1
jax: 0.10.0
libtpu: 0.0.40
codegen_flags: <defaults>
</compile_context>

<pallas_src>
import functools

import jax
import jax.numpy as jnp
from jax.experimental import pallas as pl
from jax.experimental.pallas import tpu as pltpu


def _round_up(x: int, m: int) -> int:
    return (x + m - 1) // m * m


def encoder_kernel(x_ref, w1_ref, b1_ref, w2_ref, b2_ref, w3_ref, b3_ref, o_ref):
    # All operands f32; MXU accumulates in f32.  The kernel is HBM-bound on x,
    # so full-f32 compute is free and matches the PyTorch reference closely.
    x = x_ref[...]

    # Layer 1: Linear + ReLU
    h1 = jnp.dot(x, w1_ref[...], preferred_element_type=jnp.float32)
    h1 = jnp.maximum(h1 + b1_ref[...], 0.0)

    # Layer 2: Linear + ReLU
    h2 = jnp.dot(h1, w2_ref[...], preferred_element_type=jnp.float32)
    h2 = jnp.maximum(h2 + b2_ref[...], 0.0)

    # Layer 3: Linear (no activation); 128-lane output slab -> unmasked stores.
    out = jnp.dot(h2, w3_ref[...], preferred_element_type=jnp.float32)
    o_ref[...] = (out + b3_ref[...]).astype(o_ref.dtype)


def prepare_params(w1, b1, w2, b2, w3, b3):
    """One-time prep: pad hidden (H) and latent (L) output dims up to 128 lanes.

    Zero padding is correctness-preserving: padded hidden columns stay exactly
    0 through the ReLUs (relu(x@0 + 0) == 0) and padded weight rows contribute
    nothing to the next layer.
    """
    f32 = jnp.float32
    K, H = w1.shape
    L = w3.shape[1]
    H_pad = _round_up(H, 128)
    L_pad = _round_up(L, 128)

    w1p = jnp.zeros((K, H_pad), f32).at[:, :H].set(w1.astype(f32))
    b1p = jnp.zeros((1, H_pad), f32).at[:, :H].set(b1.reshape(1, H).astype(f32))
    w2p = jnp.zeros((H_pad, H_pad), f32).at[:H, :H].set(w2.astype(f32))
    b2p = jnp.zeros((1, H_pad), f32).at[:, :H].set(b2.reshape(1, H).astype(f32))
    w3p = jnp.zeros((H_pad, L_pad), f32).at[:H, :L].set(w3.astype(f32))
    b3p = jnp.zeros((1, L_pad), f32).at[:, :L].set(b3.reshape(1, L).astype(f32))
    return (w1p, b1p, w2p, b2p, w3p, b3p)


def _choose_tile_b(B: int, max_tile_b: int) -> int:
    """Balanced, sublane-aligned batch tiles; >=2 grid steps for large B (v7x has 2 TCs)."""
    if B <= 16:
        return _round_up(B, 8)
    n_tiles = max(pl.cdiv(B, max_tile_b), 2)
    return min(_round_up(pl.cdiv(B, n_tiles), 8), _round_up(max_tile_b, 8))


@functools.partial(jax.jit, static_argnames=("latent_dim", "max_tile_b"))
def encoder_forward(x, params, latent_dim: int, max_tile_b: int = 2048):
    """x: (B, input_size) f32; params from prepare_params(). Returns (B, latent_dim) f32."""
    w1p, b1p, w2p, b2p, w3p, b3p = params
    B, K = x.shape
    H_pad = w1p.shape[1]
    L_pad = w3p.shape[1]

    tile_b = _choose_tile_b(B, max_tile_b)
    grid = (pl.cdiv(B, tile_b),)

    out = pl.pallas_call(
        encoder_kernel,
        out_shape=jax.ShapeDtypeStruct((B, L_pad), jnp.float32),
        grid_spec=pltpu.PrefetchScalarGridSpec(
            num_scalar_prefetch=0,
            grid=grid,
            in_specs=[
                # Batch-tiled activations, read straight from the caller's f32
                # array (block last-dim == full array dim -> no K padding, no copy).
                pl.BlockSpec((tile_b, K), lambda i: (i, 0)),
                # Weights / biases: constant index maps -> DMA'd once, VMEM-resident.
                pl.BlockSpec((K, H_pad), lambda i: (0, 0)),
                pl.BlockSpec((1, H_pad), lambda i: (0, 0)),
                pl.BlockSpec((H_pad, H_pad), lambda i: (0, 0)),
                pl.BlockSpec((1, H_pad), lambda i: (0, 0)),
                pl.BlockSpec((H_pad, L_pad), lambda i: (0, 0)),
                pl.BlockSpec((1, L_pad), lambda i: (0, 0)),
            ],
            out_specs=pl.BlockSpec((tile_b, L_pad), lambda i: (i, 0)),
        ),
        compiler_params=pltpu.CompilerParams(
            dimension_semantics=("parallel",),
            # 2048-row f32 tiles need ~15.5 MiB double-buffered; raise the
            # scoped VMEM limit so this also fits v5e (16 MiB default scoped).
            # 32 MiB is within every generation's budget (v7x phys = 64 MiB).
            vmem_limit_bytes=32 * 1024 * 1024,
        ),
    )(x, w1p, b1p, w2p, b2p, w3p, b3p)

    # Strip lane padding of the latent dim (fuses inside the jit).
    return out[:, :latent_dim]


def init_params(key, input_size, hidden, latent_dim):
    k1, k2, k3, k4, k5, k6 = jax.random.split(key, 6)
    w1 = jax.random.normal(k1, (input_size, hidden), jnp.float32) * (1.0 / jnp.sqrt(input_size))
    b1 = jax.random.normal(k2, (1, hidden), jnp.float32) * 0.01
    w2 = jax.random.normal(k3, (hidden, hidden), jnp.float32) * (1.0 / jnp.sqrt(hidden))
    b2 = jax.random.normal(k4, (1, hidden), jnp.float32) * 0.01
    w3 = jax.random.normal(k5, (hidden, latent_dim), jnp.float32) * (1.0 / jnp.sqrt(hidden))
    b3 = jax.random.normal(k6, (1, latent_dim), jnp.float32) * 0.01
    return w1, b1, w2, b2, w3, b3


if __name__ == "__main__":
    # Small shapes consistent with the module's forward:
    #   x: (batch, input_size); hparams['encoder_n_hidden'] = 32; latent_dim = 20
    batch = 8
    input_size = 28 * 28   # module default
    hidden = 32            # hparams['encoder_n_hidden']
    latent_dim = 20        # module default

    key = jax.random.PRNGKey(0)
    kx, kp = jax.random.split(key)
    x = jax.random.normal(kx, (batch, input_size), jnp.float32)
    raw_params = init_params(kp, input_size, hidden, latent_dim)

    # One-time parameter prep (hoisted out of the per-call path).
    params = prepare_params(*raw_params)

    out = encoder_forward(x, params, latent_dim)
    out = jax.block_until_ready(out)

    # Pure-JAX f32 reference of the same forward pass.
    w1, b1, w2, b2, w3, b3 = raw_params
    ref = jnp.maximum(x @ w1 + b1, 0.0)
    ref = jnp.maximum(ref @ w2 + b2, 0.0)
    ref = ref @ w3 + b3
    assert out.shape == (batch, latent_dim)
    assert jnp.allclose(out, ref, atol=5e-2, rtol=5e-2)

    print("KERNEL_OK")
</pallas_src>

<mosaic_0001>
module attributes {stable_mosaic.version = 11 : i64} {
  func.func @encoder_kernel(%arg0: i32, %arg1: memref<8x784xf32, #tpu.memory_space<vmem>>, %arg2: memref<784x128xf32, #tpu.memory_space<vmem>>, %arg3: memref<1x128xf32, #tpu.memory_space<vmem>>, %arg4: memref<128x128xf32, #tpu.memory_space<vmem>>, %arg5: memref<1x128xf32, #tpu.memory_space<vmem>>, %arg6: memref<128x128xf32, #tpu.memory_space<vmem>>, %arg7: memref<1x128xf32, #tpu.memory_space<vmem>>, %arg8: memref<8x128xf32, #tpu.memory_space<vmem>>) attributes {dimension_semantics = [#tpu.dimension_semantics<parallel>], iteration_bounds = array<i64: 1>, scalar_prefetch = 0 : i64, scratch_operands = 0 : i64, tpu.core_type = #tpu.core_type<tc>, window_params = [{transform_indices = @transform_0, window_bounds = array<i64: 8, 784>}, {pipeline_mode = #tpu.pipeline_mode<synchronous>, transform_indices = @transform_1, window_bounds = array<i64: 784, 128>}, {pipeline_mode = #tpu.pipeline_mode<synchronous>, transform_indices = @transform_2, window_bounds = array<i64: 1, 128>}, {pipeline_mode = #tpu.pipeline_mode<synchronous>, transform_indices = @transform_3, window_bounds = array<i64: 128, 128>}, {pipeline_mode = #tpu.pipeline_mode<synchronous>, transform_indices = @transform_4, window_bounds = array<i64: 1, 128>}, {pipeline_mode = #tpu.pipeline_mode<synchronous>, transform_indices = @transform_5, window_bounds = array<i64: 128, 128>}, {pipeline_mode = #tpu.pipeline_mode<synchronous>, transform_indices = @transform_6, window_bounds = array<i64: 1, 128>}, {transform_indices = @transform_7, window_bounds = array<i64: 8, 128>}]} {
    %c0 = arith.constant 0 : index
    %c0_0 = arith.constant 0 : index
    %0 = vector.load %arg1[%c0, %c0_0] : memref<8x784xf32, #tpu.memory_space<vmem>>, vector<8x784xf32>
    %c0_1 = arith.constant 0 : index
    %c0_2 = arith.constant 0 : index
    %1 = vector.load %arg2[%c0_1, %c0_2] : memref<784x128xf32, #tpu.memory_space<vmem>>, vector<784x128xf32>
    %cst = arith.constant dense<0.000000e+00> : vector<8x128xf32>
    %2 = tpu.matmul %0, %1, %cst {dimension_numbers = #tpu.dot_dimension_numbers<[1], [0], [0], [1], [0, 0, 1, 1], [], []>} : vector<8x784xf32>, vector<784x128xf32>, vector<8x128xf32> -> vector<8x128xf32>
    %c0_3 = arith.constant 0 : index
    %c0_4 = arith.constant 0 : index
    %3 = vector.load %arg3[%c0_3, %c0_4] : memref<1x128xf32, #tpu.memory_space<vmem>>, vector<1x128xf32>
    %4 = vector.broadcast %3 : vector<1x128xf32> to vector<8x128xf32>
    %5 = arith.addf %2, %4 : vector<8x128xf32>
    %cst_5 = arith.constant 0.000000e+00 : f32
    %6 = vector.broadcast %cst_5 : f32 to vector<8x128xf32>
    %7 = arith.maximumf %5, %6 : vector<8x128xf32>
    %c0_6 = arith.constant 0 : index
    %c0_7 = arith.constant 0 : index
    %8 = vector.load %arg4[%c0_6, %c0_7] : memref<128x128xf32, #tpu.memory_space<vmem>>, vector<128x128xf32>
    %cst_8 = arith.constant dense<0.000000e+00> : vector<8x128xf32>
    %9 = tpu.matmul %7, %8, %cst_8 {dimension_numbers = #tpu.dot_dimension_numbers<[1], [0], [0], [1], [0, 0, 1, 1], [], []>} : vector<8x128xf32>, vector<128x128xf32>, vector<8x128xf32> -> vector<8x128xf32>
    %c0_9 = arith.constant 0 : index
    %c0_10 = arith.constant 0 : index
    %10 = vector.load %arg5[%c0_9, %c0_10] : memref<1x128xf32, #tpu.memory_space<vmem>>, vector<1x128xf32>
    %11 = vector.broadcast %10 : vector<1x128xf32> to vector<8x128xf32>
    %12 = arith.addf %9, %11 : vector<8x128xf32>
    %cst_11 = arith.constant 0.000000e+00 : f32
    %13 = vector.broadcast %cst_11 : f32 to vector<8x128xf32>
    %14 = arith.maximumf %12, %13 : vector<8x128xf32>
    %c0_12 = arith.constant 0 : index
    %c0_13 = arith.constant 0 : index
    %15 = vector.load %arg6[%c0_12, %c0_13] : memref<128x128xf32, #tpu.memory_space<vmem>>, vector<128x128xf32>
    %cst_14 = arith.constant dense<0.000000e+00> : vector<8x128xf32>
    %16 = tpu.matmul %14, %15, %cst_14 {dimension_numbers = #tpu.dot_dimension_numbers<[1], [0], [0], [1], [0, 0, 1, 1], [], []>} : vector<8x128xf32>, vector<128x128xf32>, vector<8x128xf32> -> vector<8x128xf32>
    %c0_15 = arith.constant 0 : index
    %c0_16 = arith.constant 0 : index
    %17 = vector.load %arg7[%c0_15, %c0_16] : memref<1x128xf32, #tpu.memory_space<vmem>>, vector<1x128xf32>
    %18 = vector.broadcast %17 : vector<1x128xf32> to vector<8x128xf32>
    %19 = arith.addf %16, %18 : vector<8x128xf32>
    %c0_17 = arith.constant 0 : index
    %c0_18 = arith.constant 0 : index
    %20 = vector.load %arg8[%c0_17, %c0_18] : memref<8x128xf32, #tpu.memory_space<vmem>>, vector<8x128xf32>
    tpu.vector_store %arg8[%c0_17, %c0_18], %19 {strides = array<i32>} : memref<8x128xf32, #tpu.memory_space<vmem>>, vector<8x128xf32>,
    return
  }
  func.func @transform_0(%arg0: i32) -> (i32, i32) {
    %c0_i32 = arith.constant 0 : i32
    %c0_i32_0 = arith.constant 0 : i32
    return %arg0, %c0_i32 : i32, i32
  }
  func.func @transform_1(%arg0: i32) -> (i32, i32) {
    %c0_i32 = arith.constant 0 : i32
    %c0_i32_0 = arith.constant 0 : i32
    %c0_i32_1 = arith.constant 0 : i32
    return %c0_i32, %c0_i32_0 : i32, i32
  }
  func.func @transform_2(%arg0: i32) -> (i32, i32) {
    %c0_i32 = arith.constant 0 : i32
    %c0_i32_0 = arith.constant 0 : i32
    %c0_i32_1 = arith.constant 0 : i32
    return %c0_i32, %c0_i32_0 : i32, i32
  }
  func.func @transform_3(%arg0: i32) -> (i32, i32) {
    %c0_i32 = arith.constant 0 : i32
    %c0_i32_0 = arith.constant 0 : i32
    %c0_i32_1 = arith.constant 0 : i32
    return %c0_i32, %c0_i32_0 : i32, i32
  }
  func.func @transform_4(%arg0: i32) -> (i32, i32) {
    %c0_i32 = arith.constant 0 : i32
    %c0_i32_0 = arith.constant 0 : i32
    %c0_i32_1 = arith.constant 0 : i32
    return %c0_i32, %c0_i32_0 : i32, i32
  }
  func.func @transform_5(%arg0: i32) -> (i32, i32) {
    %c0_i32 = arith.constant 0 : i32
    %c0_i32_0 = arith.constant 0 : i32
    %c0_i32_1 = arith.constant 0 : i32
    return %c0_i32, %c0_i32_0 : i32, i32
  }
  func.func @transform_6(%arg0: i32) -> (i32, i32) {
    %c0_i32 = arith.constant 0 : i32
    %c0_i32_0 = arith.constant 0 : i32
    %c0_i32_1 = arith.constant 0 : i32
    return %c0_i32, %c0_i32_0 : i32, i32
  }
  func.func @transform_7(%arg0: i32) -> (i32, i32) {
    %c0_i32 = arith.constant 0 : i32
    %c0_i32_0 = arith.constant 0 : i32
    return %arg0, %c0_i32 : i32, i32
  }
}

</mosaic_0001>

<llo_original>
// kernel: encoder_forward.1
$region0: #{encoder_forward.1}
  #allocation0 [shape = 'u32[]', space=smem, size = 0x4, offset = 0x4, fixed_abs, tag = 'smem constant byte address 0x4 - core index']
  #allocation1 [shape = 'u32[144,128]{1,0:T(1,128)}', space=vmem, size = 0x12000, scoped, tag = 'internal scratch']
  %s0 = inlined_call_operand.hbm [shape: f32[8,784], index: 0, kind: input, shape index: {}]
  %s1 = inlined_call_operand.hbm [shape: f32[784,128], index: 1, kind: input, shape index: {}]
  %s2 = inlined_call_operand.vmem [shape: f32[1,128], index: 2, kind: input, shape index: {}]
  %s3 = inlined_call_operand.hbm [shape: f32[128,128], index: 3, kind: input, shape index: {}]
  %s4 = inlined_call_operand.vmem [shape: f32[1,128], index: 4, kind: input, shape index: {}]
  %s5 = inlined_call_operand.hbm [shape: f32[128,128], index: 5, kind: input, shape index: {}]
  %s6 = inlined_call_operand.vmem [shape: f32[1,128], index: 6, kind: input, shape index: {}]
  %s7 = inlined_call_operand.hbm [shape: f32[8,128], index: 7, kind: output, shape index: {}]
  %s8 = sld [smem:[#allocation0]]
  $region54: #{encoder_forward.1} parent=0
    _
  %s10 = ssub.s32 1, %s8
  %s11 = scalar_select 0, %s10, %s8
  $region1: #{encoder_forward.1} parent=0
    #allocation2 [shape = 'u8[28672]{0}', space=vmem, size = 0x7000, scoped, tag = 'input window, operand 0, single buffered']
    #allocation3 [shape = 's32[1]{0}', space=sflag, size = 0x4, scoped, tag = 'scoped memory for encoder_forward.1']
    #allocation4 [shape = 's32[1]{0}', space=sflag, size = 0x4, scoped, tag = 'scoped memory for encoder_forward.1']
    #allocation5 [shape = 'u8[401408]{0}', space=vmem, size = 0x62000, scoped, tag = 'input window, operand 1, single buffered']
    #allocation6 [shape = 's32[1]{0}', space=sflag, size = 0x4, scoped, tag = 'scoped memory for encoder_forward.1']
    #allocation7 [shape = 'u8[65536]{0}', space=vmem, size = 0x10000, scoped, tag = 'input window, operand 3, single buffered']
    #allocation8 [shape = 'u8[65536]{0}', space=vmem, size = 0x10000, scoped, tag = 'input window, operand 5, single buffered']
    #allocation9 [shape = 's32[1]{0}', space=sflag, size = 0x4, scoped, tag = 'scoped memory for encoder_forward.1']
    #allocation10 [shape = 'u8[4096]{0}', space=vmem, size = 0x1000, scoped, tag = 'output window, operand 0, single buffered']
    %12 = vsyncpa [#allocation3], 0
    %13 = vsyncpa [#allocation6], 0
    %14 = vsyncpa [#allocation9], 0
    %15 = vsyncpa [#allocation4], 0
    // Predicated region
    $region2: #{encoder_forward.1} parent=1 // pred_check
      _
    $region3: #{encoder_forward.1} parent=1 // pred_check_branch
      %17 = sbr.rel (0) target = $region5
    $region4: #{encoder_forward.1} parent=1 // pred_region
      %s19 = ssub.s32 896, 896
      %20 = vsyncadd [#allocation3], %s19
      %s22 = sshll.u32 [#allocation2], 4
      %s23 = int_to_ptr.vmem [resolvable:$true] %s22
      %25 = dma.hbm_to_vmem [thread:$0]  %s0, 896, %s23, [#allocation3]
    $region5: #{encoder_forward.1} parent=1 // pred_fallthru
      _
    // Predicated region
    $region6: #{encoder_forward.1} parent=1 // pred_check
      _
    $region7: #{encoder_forward.1} parent=1 // pred_check_branch
      %27 = sbr.rel (0) target = $region9
    $region8: #{encoder_forward.1} parent=1 // pred_region
      %s29 = ssub.s32 12544, 12544
      %30 = vsyncadd [#allocation6], %s29
      %s31 = sshll.u32 [#allocation5], 4
      %s32 = int_to_ptr.vmem [resolvable:$true] %s31
      %37 = dma.hbm_to_vmem [thread:$0]  %s1, 12544, %s32, [#allocation6], 128, 128, 8
    $region9: #{encoder_forward.1} parent=1 // pred_fallthru
      _
    // Predicated region
    $region10: #{encoder_forward.1} parent=1 // pred_check
      _
    $region11: #{encoder_forward.1} parent=1 // pred_check_branch
      %39 = sbr.rel (0) target = $region13
    $region12: #{encoder_forward.1} parent=1 // pred_region
      _
    $region13: #{encoder_forward.1} parent=1 // pred_fallthru
      _
    // Predicated region
    $region14: #{encoder_forward.1} parent=1 // pred_check
      _
    $region15: #{encoder_forward.1} parent=1 // pred_check_branch
      %41 = sbr.rel (0) target = $region17
    $region16: #{encoder_forward.1} parent=1 // pred_region
      %s43 = ssub.s32 2048, 2048
      %44 = vsyncadd [#allocation6], %s43
      %s45 = sshll.u32 [#allocation7], 4
      %s46 = int_to_ptr.vmem [resolvable:$true] %s45
      %51 = dma.hbm_to_vmem [thread:$0]  %s3, 2048, %s46, [#allocation6], 128, 128, 8
    $region17: #{encoder_forward.1} parent=1 // pred_fallthru
      _
    // Predicated region
    $region18: #{encoder_forward.1} parent=1 // pred_check
      _
    $region19: #{encoder_forward.1} parent=1 // pred_check_branch
      %53 = sbr.rel (0) target = $region21
    $region20: #{encoder_forward.1} parent=1 // pred_region
      _
    $region21: #{encoder_forward.1} parent=1 // pred_fallthru
      _
    // Predicated region
    $region22: #{encoder_forward.1} parent=1 // pred_check
      _
    $region23: #{encoder_forward.1} parent=1 // pred_check_branch
      %55 = sbr.rel (0) target = $region25
    $region24: #{encoder_forward.1} parent=1 // pred_region
      %s57 = ssub.s32 2048, 2048
      %58 = vsyncadd [#allocation9], %s57
      %s59 = sshll.u32 [#allocation8], 4
      %s60 = int_to_ptr.vmem [resolvable:$true] %s59
      %65 = dma.hbm_to_vmem [thread:$0]  %s5, 2048, %s60, [#allocation9], 128, 128, 8
    $region25: #{encoder_forward.1} parent=1 // pred_fallthru
      _
    // Predicated region
    $region26: #{encoder_forward.1} parent=1 // pred_check
      _
    $region27: #{encoder_forward.1} parent=1 // pred_check_branch
      %67 = sbr.rel (0) target = $region29
    $region28: #{encoder_forward.1} parent=1 // pred_region
      _
    $region29: #{encoder_forward.1} parent=1 // pred_fallthru
      _
    // Predicated region
    $region30: #{encoder_forward.1} parent=1 // pred_check
      _
    $region31: #{encoder_forward.1} parent=1 // pred_check_branch
      %69 = sbr.rel (0) target = $region33
    $region32: #{encoder_forward.1} parent=1 // pred_region
      %70 = dma.done [#allocation3], 896
    $region33: #{encoder_forward.1} parent=1 // pred_fallthru
      _
    // Predicated region
    $region34: #{encoder_forward.1} parent=1 // pred_check
      _
    $region35: #{encoder_forward.1} parent=1 // pred_check_branch
      %72 = sbr.rel (0) target = $region37
    $region36: #{encoder_forward.1} parent=1 // pred_region
      %73 = dma.done [#allocation6], 12544
    $region37: #{encoder_forward.1} parent=1 // pred_fallthru
      _
    // Predicated region
    $region38: #{encoder_forward.1} parent=1 // pred_check
      _
    $region39: #{encoder_forward.1} parent=1 // pred_check_branch
      %75 = sbr.rel (0) target = $region41
    $region40: #{encoder_forward.1} parent=1 // pred_region
      %76 = dma.done [#allocation6], 2048
    $region41: #{encoder_forward.1} parent=1 // pred_fallthru
      _
    // Predicated region
    $region42: #{encoder_forward.1} parent=1 // pred_check
      _
    $region43: #{encoder_forward.1} parent=1 // pred_check_branch
      %78 = sbr.rel (0) target = $region45
    $region44: #{encoder_forward.1} parent=1 // pred_region
      %79 = dma.done [#allocation9], 2048
    $region45: #{encoder_forward.1} parent=1 // pred_fallthru
      _
    %v80 = vld [vmem:[#allocation2] sm:$0xff]
    %v81 = vld [vmem:[#allocation2 + $0x8] sm:$0xff]
    %v82 = vld [vmem:[#allocation2 + $0x10] sm:$0xff]
    %v83 = vld [vmem:[#allocation2 + $0x18] sm:$0xff]
    %v84 = vld [vmem:[#allocation2 + $0x20] sm:$0xff]
    %v85 = vld [vmem:[#allocation2 + $0x28] sm:$0xff]
    %v86 = vld [vmem:[#allocation2 + $0x30] sm:$0xff]
    %v87 = vld [vmem:[#allocation5] sm:$0xff]
    %v88 = vld [vmem:[#allocation5 + $0x8] sm:$0xff]
    %v89 = vld [vmem:[#allocation5 + $0x10] sm:$0xff]
    %v90 = vld [vmem:[#allocation5 + $0x18] sm:$0xff]
    %v91 = vld [vmem:[#allocation5 + $0x20] sm:$0xff]
    %v92 = vld [vmem:[#allocation5 + $0x28] sm:$0xff]
    %v93 = vld [vmem:[#allocation5 + $0x30] sm:$0xff]
    %v94 = vld [vmem:[#allocation5 + $0x38] sm:$0xff]
    %v95 = vld [vmem:[#allocation5 + $0x40] sm:$0xff]
    %v96 = vld [vmem:[#allocation5 + $0x48] sm:$0xff]
    %v97 = vld [vmem:[#allocation5 + $0x50] sm:$0xff]
    %v98 = vld [vmem:[#allocation5 + $0x58] sm:$0xff]
    %v99 = vld [vmem:[#allocation5 + $0x60] sm:$0xff]
    %v100 = vld [vmem:[#allocation5 + $0x68] sm:$0xff]
    %v101 = vld [vmem:[#allocation5 + $0x70] sm:$0xff]
    %v102 = vld [vmem:[#allocation5 + $0x78] sm:$0xff]
    %v103 = vld [vmem:[#allocation5 + $0x80] sm:$0xff]
    %v104 = vld [vmem:[#allocation5 + $0x88] sm:$0xff]
    %v105 = vld [vmem:[#allocation5 + $0x90] sm:$0xff]
    %v106 = vld [vmem:[#allocation5 + $0x98] sm:$0xff]
    %v107 = vld [vmem:[#allocation5 + $0xa0] sm:$0xff]
    %v108 = vld [vmem:[#allocation5 + $0xa8] sm:$0xff]
    %v109 = vld [vmem:[#allocation5 + $0xb0] sm:$0xff]
    %v110 = vld [vmem:[#allocation5 + $0xb8] sm:$0xff]
    %v111 = vld [vmem:[#allocation5 + $0xc0] sm:$0xff]
    %v112 = vld [vmem:[#allocation5 + $0xc8] sm:$0xff]
    %v113 = vld [vmem:[#allocation5 + $0xd0] sm:$0xff]
    %v114 = vld [vmem:[#allocation5 + $0xd8] sm:$0xff]
    %v115 = vld [vmem:[#allocation5 + $0xe0] sm:$0xff]
    %v116 = vld [vmem:[#allocation5 + $0xe8] sm:$0xff]
    %v117 = vld [vmem:[#allocation5 + $0xf0] sm:$0xff]
    %v118 = vld [vmem:[#allocation5 + $0xf8] sm:$0xff]
    %v119 = vld [vmem:[#allocation5 + $0x100] sm:$0xff]
    %v120 = vld [vmem:[#allocation5 + $0x108] sm:$0xff]
    %v121 = vld [vmem:[#allocation5 + $0x110] sm:$0xff]
    %v122 = vld [vmem:[#allocation5 + $0x118] sm:$0xff]
    %v123 = vld [vmem:[#allocation5 + $0x120] sm:$0xff]
    %v124 = vld [vmem:[#allocation5 + $0x128] sm:$0xff]
    %v125 = vld [vmem:[#allocation5 + $0x130] sm:$0xff]
    %v126 = vld [vmem:[#allocation5 + $0x138] sm:$0xff]
    %v127 = vld [vmem:[#allocation5 + $0x140] sm:$0xff]
    %v128 = vld [vmem:[#allocation5 + $0x148] sm:$0xff]
    %v129 = vld [vmem:[#allocation5 + $0x150] sm:$0xff]
    %v130 = vld [vmem:[#allocation5 + $0x158] sm:$0xff]
    %v131 = vld [vmem:[#allocation5 + $0x160] sm:$0xff]
    %v132 = vld [vmem:[#allocation5 + $0x168] sm:$0xff]
    %v133 = vld [vmem:[#allocation5 + $0x170] sm:$0xff]
    %v134 = vld [vmem:[#allocation5 + $0x178] sm:$0xff]
    %v135 = vld [vmem:[#allocation5 + $0x180] sm:$0xff]
    %v136 = vld [vmem:[#allocation5 + $0x188] sm:$0xff]
    %v137 = vld [vmem:[#allocation5 + $0x190] sm:$0xff]
    %v138 = vld [vmem:[#allocation5 + $0x198] sm:$0xff]
    %v139 = vld [vmem:[#allocation5 + $0x1a0] sm:$0xff]
    %v140 = vld [vmem:[#allocation5 + $0x1a8] sm:$0xff]
    %v141 = vld [vmem:[#allocation5 + $0x1b0] sm:$0xff]
    %v142 = vld [vmem:[#allocation5 + $0x1b8] sm:$0xff]
    %v143 = vld [vmem:[#allocation5 + $0x1c0] sm:$0xff]
    %v144 = vld [vmem:[#allocation5 + $0x1c8] sm:$0xff]
    %v145 = vld [vmem:[#allocation5 + $0x1d0] sm:$0xff]
    %v146 = vld [vmem:[#allocation5 + $0x1d8] sm:$0xff]
    %v147 = vld [vmem:[#allocation5 + $0x1e0] sm:$0xff]
    %v148 = vld [vmem:[#allocation5 + $0x1e8] sm:$0xff]
    %v149 = vld [vmem:[#allocation5 + $0x1f0] sm:$0xff]
    %v150 = vld [vmem:[#allocation5 + $0x1f8] sm:$0xff]
    %v151 = vld [vmem:[#allocation5 + $0x200] sm:$0xff]
    %v152 = vld [vmem:[#allocation5 + $0x208] sm:$0xff]
    %v153 = vld [vmem:[#allocation5 + $0x210] sm:$0xff]
    %v154 = vld [vmem:[#allocation5 + $0x218] sm:$0xff]
    %v155 = vld [vmem:[#allocation5 + $0x220] sm:$0xff]
    %v156 = vld [vmem:[#allocation5 + $0x228] sm:$0xff]
    %v157 = vld [vmem:[#allocation5 + $0x230] sm:$0xff]
    %v158 = vld [vmem:[#allocation5 + $0x238] sm:$0xff]
    %v159 = vld [vmem:[#allocation5 + $0x240] sm:$0xff]
    %v160 = vld [vmem:[#allocation5 + $0x248] sm:$0xff]
    %v161 = vld [vmem:[#allocation5 + $0x250] sm:$0xff]
    %v162 = vld [vmem:[#allocation5 + $0x258] sm:$0xff]
    %v163 = vld [vmem:[#allocation5 + $0x260] sm:$0xff]
    %v164 = vld [vmem:[#allocation5 + $0x268] sm:$0xff]
    %v165 = vld [vmem:[#allocation5 + $0x270] sm:$0xff]
    %v166 = vld [vmem:[#allocation5 + $0x278] sm:$0xff]
    %v167 = vld [vmem:[#allocation5 + $0x280] sm:$0xff]
    %v168 = vld [vmem:[#allocation5 + $0x288] sm:$0xff]
    %v169 = vld [vmem:[#allocation5 + $0x290] sm:$0xff]
    %v170 = vld [vmem:[#allocation5 + $0x298] sm:$0xff]
    %v171 = vld [vmem:[#allocation5 + $0x2a0] sm:$0xff]
    %v172 = vld [vmem:[#allocation5 + $0x2a8] sm:$0xff]
    %v173 = vld [vmem:[#allocation5 + $0x2b0] sm:$0xff]
    %v174 = vld [vmem:[#allocation5 + $0x2b8] sm:$0xff]
    %v175 = vld [vmem:[#allocation5 + $0x2c0] sm:$0xff]
    %v176 = vld [vmem:[#allocation5 + $0x2c8] sm:$0xff]
    %v177 = vld [vmem:[#allocation5 + $0x2d0] sm:$0xff]
    %v178 = vld [vmem:[#allocation5 + $0x2d8] sm:$0xff]
    %v179 = vld [vmem:[#allocation5 + $0x2e0] sm:$0xff]
    %v180 = vld [vmem:[#allocation5 + $0x2e8] sm:$0xff]
    %v181 = vld [vmem:[#allocation5 + $0x2f0] sm:$0xff]
    %v182 = vld [vmem:[#allocation5 + $0x2f8] sm:$0xff]
    %v183 = vld [vmem:[#allocation5 + $0x300] sm:$0xff]
    %v184 = vld [vmem:[#allocation5 + $0x308] sm:$0xff]
    %v185 = vld [vmem:[%s2] sm:$0x1]
    %v187 = vlaneseq
    %v188 = vshrl.u32 %v187, 7
    %v189 = vsub.s32 0, %v188
    %v190 = vrot.slane %v185, %v189
    %vm192 = vcmask 130048
    %v194 = vsel %vm192, %v86, 0
    %196 = vmatprep.subr.mxu0 0.0
    %197 = vmatpush1.msra.mxu0 %v87
    %198 = vmatprep.subr.mxu0 0.0
    %199 = vmatpush1.msra.mxu0 %v88
    %200 = vmatprep.subr.mxu0 0.0
    %201 = vmatpush1.msra.mxu0 %v89
    %202 = vmatprep.subr.mxu0 0.0
    %203 = vmatpush1.msra.mxu0 %v90
    %204 = vmatprep.subr.mxu0 0.0
    %205 = vmatpush1.msra.mxu0 %v91
    %206 = vmatprep.subr.mxu0 0.0
    %207 = vmatpush1.msra.mxu0 %v92
    %208 = vmatprep.subr.mxu0 0.0
    %209 = vmatpush1.msra.mxu0 %v93
    %210 = vmatprep.subr.mxu0 0.0
    %211 = vmatpush1.msra.mxu0 %v94
    %212 = vmatprep.subr.mxu0 0.0
    %213 = vmatpush1.msra.mxu0 %v95
    %214 = vmatprep.subr.mxu0 0.0
    %215 = vmatpush1.msra.mxu0 %v96
    %216 = vmatprep.subr.mxu0 0.0
    %217 = vmatpush1.msra.mxu0 %v97
    %218 = vmatprep.subr.mxu0 0.0
    %219 = vmatpush1.msra.mxu0 %v98
    %220 = vmatprep.subr.mxu0 0.0
    %221 = vmatpush1.msra.mxu0 %v99
    %222 = vmatprep.subr.mxu0 0.0
    %223 = vmatpush1.msra.mxu0 %v100
    %224 = vmatprep.subr.mxu0 0.0
    %225 = vmatpush1.msra.mxu0 %v101
    %226 = vmatprep.subr.mxu0 0.0
    %227 = vmatpush1.msra.mxu0 %v102
    %228 = vmatprep.subr.mxu0 0.0
    %229 = vmatpush1.msra.mxu0 %v103
    %230 = vmatprep.subr.mxu0 0.0
    %231 = vmatpush1.msra.mxu0 %v104
    %232 = vmatprep.subr.mxu0 0.0
    %233 = vmatpush1.msra.mxu0 %v105
    %234 = vmatprep.subr.mxu0 0.0
    %235 = vmatpush1.msra.mxu0 %v106
    %236 = vmatprep.subr.mxu0 0.0
    %237 = vmatpush1.msra.mxu0 %v107
    %238 = vmatprep.subr.mxu0 0.0
    %239 = vmatpush1.msra.mxu0 %v108
    %240 = vmatprep.subr.mxu0 0.0
    %241 = vmatpush1.msra.mxu0 %v109
    %242 = vmatprep.subr.mxu0 0.0
    %243 = vmatpush1.msra.mxu0 %v110
    %244 = vmatprep.subr.mxu0 0.0
    %245 = vmatpush1.msra.mxu0 %v111
    %246 = vmatprep.subr.mxu0 0.0
    %247 = vmatpush1.msra.mxu0 %v112
    %248 = vmatprep.subr.mxu0 0.0
    %249 = vmatpush1.msra.mxu0 %v113
    %250 = vmatprep.subr.mxu0 0.0
    %251 = vmatpush1.msra.mxu0 %v114
    %252 = vmatprep.subr.mxu0 0.0
    %253 = vmatpush1.msra.mxu0 %v115
    %254 = vmatprep.subr.mxu0 0.0
    %255 = vmatpush1.msra.mxu0 %v116
    %256 = vmatprep.subr.mxu0 0.0
    %257 = vmatpush1.msra.mxu0 %v117
    %258 = vmatprep.subr.mxu0 0.0
    %259 = vmatpush1.msra.mxu0 %v118
    %260 = vmatprep.mubr.f32.mxu0 %v81
    %261 = vmatmul.mubr.f32.gmra.mrb[0].mxu0 %v80
    %v262 = vpop.f32.mrb[0].mxu0
    %v263 = vadd.f32 %v190, %v262
    %v264 = vpop.f32.mrb[0].mxu0
    %265 = vdwg.mxu0
    %266 = vmatprep.subr.mxu0 0.0
    %267 = vmatpush1.msra.mxu0 %v119
    %268 = vmatprep.subr.mxu0 0.0
    %269 = vmatpush1.msra.mxu0 %v120
    %270 = vmatprep.subr.mxu0 0.0
    %271 = vmatpush1.msra.mxu0 %v121
    %272 = vmatprep.subr.mxu0 0.0
    %273 = vmatpush1.msra.mxu0 %v122
    %274 = vmatprep.subr.mxu0 0.0
    %275 = vmatpush1.msra.mxu0 %v123
    %276 = vmatprep.subr.mxu0 0.0
    %277 = vmatpush1.msra.mxu0 %v124
    %278 = vmatprep.subr.mxu0 0.0
    %279 = vmatpush1.msra.mxu0 %v125
    %280 = vmatprep.subr.mxu0 0.0
    %281 = vmatpush1.msra.mxu0 %v126
    %282 = vmatprep.subr.mxu0 0.0
    %283 = vmatpush1.msra.mxu0 %v127
    %284 = vmatprep.subr.mxu0 0.0
    %285 = vmatpush1.msra.mxu0 %v128
    %286 = vmatprep.subr.mxu0 0.0
    %287 = vmatpush1.msra.mxu0 %v129
    %288 = vmatprep.subr.mxu0 0.0
    %289 = vmatpush1.msra.mxu0 %v130
    %290 = vmatprep.subr.mxu0 0.0
    %291 = vmatpush1.msra.mxu0 %v131
    %292 = vmatprep.subr.mxu0 0.0
    %293 = vmatpush1.msra.mxu0 %v132
    %294 = vmatprep.subr.mxu0 0.0
    %295 = vmatpush1.msra.mxu0 %v133
    %296 = vmatprep.subr.mxu0 0.0
    %297 = vmatpush1.msra.mxu0 %v134
    %298 = vmatprep.subr.mxu0 0.0
    %299 = vmatpush1.msra.mxu0 %v135
    %300 = vmatprep.subr.mxu0 0.0
    %301 = vmatpush1.msra.mxu0 %v136
    %302 = vmatprep.subr.mxu0 0.0
    %303 = vmatpush1.msra.mxu0 %v137
    %304 = vmatprep.subr.mxu0 0.0
    %305 = vmatpush1.msra.mxu0 %v138
    %306 = vmatprep.subr.mxu0 0.0
    %307 = vmatpush1.msra.mxu0 %v139
    %308 = vmatprep.subr.mxu0 0.0
    %309 = vmatpush1.msra.mxu0 %v140
    %310 = vmatprep.subr.mxu0 0.0
    %311 = vmatpush1.msra.mxu0 %v141
    %312 = vmatprep.subr.mxu0 0.0
    %313 = vmatpush1.msra.mxu0 %v142
    %314 = vmatprep.subr.mxu0 0.0
    %315 = vmatpush1.msra.mxu0 %v143
    %316 = vmatprep.subr.mxu0 0.0
    %317 = vmatpush1.msra.mxu0 %v144
    %318 = vmatprep.subr.mxu0 0.0
    %319 = vmatpush1.msra.mxu0 %v145
    %320 = vmatprep.subr.mxu0 0.0
    %321 = vmatpush1.msra.mxu0 %v146
    %322 = vmatprep.subr.mxu0 0.0
    %323 = vmatpush1.msra.mxu0 %v147
    %324 = vmatprep.subr.mxu0 0.0
    %325 = vmatpush1.msra.mxu0 %v148
    %326 = vmatprep.subr.mxu0 0.0
    %327 = vmatpush1.msra.mxu0 %v149
    %328 = vmatprep.subr.mxu0 0.0
    %329 = vmatpush1.msra.mxu0 %v150
    %330 = vmatprep.mubr.f32.mxu0 %v83
    %331 = vmatmul.mubr.f32.gmra.mrb[0].mxu0 %v82
    %v332 = vpop.f32.mrb[0].mxu0
    %v333 = vadd.f32 %v263, %v332
    %v334 = vpop.f32.mrb[0].mxu0
    %335 = vdwg.mxu0
    %336 = vmatprep.subr.mxu0 0.0
    %337 = vmatpush1.msra.mxu0 %v151
    %338 = vmatprep.subr.mxu0 0.0
    %339 = vmatpush1.msra.mxu0 %v152
    %340 = vmatprep.subr.mxu0 0.0
    %341 = vmatpush1.msra.mxu0 %v153
    %342 = vmatprep.subr.mxu0 0.0
    %343 = vmatpush1.msra.mxu0 %v154
    %344 = vmatprep.subr.mxu0 0.0
    %345 = vmatpush1.msra.mxu0 %v155
    %346 = vmatprep.subr.mxu0 0.0
    %347 = vmatpush1.msra.mxu0 %v156
    %348 = vmatprep.subr.mxu0 0.0
    %349 = vmatpush1.msra.mxu0 %v157
    %350 = vmatprep.subr.mxu0 0.0
    %351 = vmatpush1.msra.mxu0 %v158
    %352 = vmatprep.subr.mxu0 0.0
    %353 = vmatpush1.msra.mxu0 %v159
    %354 = vmatprep.subr.mxu0 0.0
    %355 = vmatpush1.msra.mxu0 %v160
    %356 = vmatprep.subr.mxu0 0.0
    %357 = vmatpush1.msra.mxu0 %v161
    %358 = vmatprep.subr.mxu0 0.0
    %359 = vmatpush1.msra.mxu0 %v162
    %360 = vmatprep.subr.mxu0 0.0
    %361 = vmatpush1.msra.mxu0 %v163
    %362 = vmatprep.subr.mxu0 0.0
    %363 = vmatpush1.msra.mxu0 %v164
    %364 = vmatprep.subr.mxu0 0.0
    %365 = vmatpush1.msra.mxu0 %v165
    %366 = vmatprep.subr.mxu0 0.0
    %367 = vmatpush1.msra.mxu0 %v166
    %368 = vmatprep.subr.mxu0 0.0
    %369 = vmatpush1.msra.mxu0 %v167
    %370 = vmatprep.subr.mxu0 0.0
    %371 = vmatpush1.msra.mxu0 %v168
    %372 = vmatprep.subr.mxu0 0.0
    %373 = vmatpush1.msra.mxu0 %v169
    %374 = vmatprep.subr.mxu0 0.0
    %375 = vmatpush1.msra.mxu0 %v170
    %376 = vmatprep.subr.mxu0 0.0
    %377 = vmatpush1.msra.mxu0 %v171
    %378 = vmatprep.subr.mxu0 0.0
    %379 = vmatpush1.msra.mxu0 %v172
    %380 = vmatprep.subr.mxu0 0.0
    %381 = vmatpush1.msra.mxu0 %v173
    %382 = vmatprep.subr.mxu0 0.0
    %383 = vmatpush1.msra.mxu0 %v174
    %384 = vmatprep.subr.mxu0 0.0
    %385 = vmatpush1.msra.mxu0 %v175
    %386 = vmatprep.subr.mxu0 0.0
    %387 = vmatpush1.msra.mxu0 %v176
    %388 = vmatprep.subr.mxu0 0.0
    %389 = vmatpush1.msra.mxu0 %v177
    %390 = vmatprep.subr.mxu0 0.0
    %391 = vmatpush1.msra.mxu0 %v178
    %392 = vmatprep.subr.mxu0 0.0
    %393 = vmatpush1.msra.mxu0 %v179
    %394 = vmatprep.subr.mxu0 0.0
    %395 = vmatpush1.msra.mxu0 %v180
    %396 = vmatprep.subr.mxu0 0.0
    %397 = vmatpush1.msra.mxu0 %v181
    %398 = vmatprep.subr.mxu0 0.0
    %399 = vmatpush1.msra.mxu0 %v182
    %400 = vmatprep.mubr.f32.mxu0 %v85
    %401 = vmatmul.mubr.f32.gmra.mrb[0].mxu0 %v84
    %v402 = vpop.f32.mrb[0].mxu0
    %v403 = vadd.f32 %v333, %v402
    %v404 = vpop.f32.mrb[0].mxu0
    %405 = vdwg.mxu0
    %406 = vmatprep.subr.mxu0 0.0
    %407 = vmatpush1.msra.mxu0 %v183
    %408 = vmatprep.subr.mxu0 0.0
    %409 = vmatpush1.msra.mxu0 %v184
    %410 = vmatprep.subr.mxu0 0.0
    %411 = vmatpush1.msra.mxu0 0.0
    %412 = vmatprep.subr.mxu0 0.0
    %413 = vmatpush1.msra.mxu0 0.0
    %414 = vmatprep.subr.mxu0 0.0
    %415 = vmatpush1.msra.mxu0 0.0
    %416 = vmatprep.subr.mxu0 0.0
    %417 = vmatpush1.msra.mxu0 0.0
    %418 = vmatprep.subr.mxu0 0.0
    %419 = vmatpush1.msra.mxu0 0.0
    %420 = vmatprep.subr.mxu0 0.0
    %421 = vmatpush1.msra.mxu0 0.0
    %422 = vmatprep.subr.mxu0 0.0
    %423 = vmatpush1.msra.mxu0 0.0
    %424 = vmatprep.subr.mxu0 0.0
    %425 = vmatpush1.msra.mxu0 0.0
    %426 = vmatprep.subr.mxu0 0.0
    %427 = vmatpush1.msra.mxu0 0.0
    %428 = vmatprep.subr.mxu0 0.0
    %429 = vmatpush1.msra.mxu0 0.0
    %430 = vmatprep.subr.mxu0 0.0
    %431 = vmatpush1.msra.mxu0 0.0
    %432 = vmatprep.subr.mxu0 0.0
    %433 = vmatpush1.msra.mxu0 0.0
    %434 = vmatprep.subr.mxu0 0.0
    %435 = vmatpush1.msra.mxu0 0.0
    %436 = vmatprep.subr.mxu0 0.0
    %437 = vmatpush1.msra.mxu0 0.0
    %438 = vmatprep.subr.mxu0 0.0
    %439 = vmatpush1.msra.mxu0 0.0
    %440 = vmatprep.subr.mxu0 0.0
    %441 = vmatpush1.msra.mxu0 0.0
    %442 = vmatprep.subr.mxu0 0.0
    %443 = vmatpush1.msra.mxu0 0.0
    %444 = vmatprep.subr.mxu0 0.0
    %445 = vmatpush1.msra.mxu0 0.0
    %446 = vmatprep.subr.mxu0 0.0
    %447 = vmatpush1.msra.mxu0 0.0
    %448 = vmatprep.subr.mxu0 0.0
    %449 = vmatpush1.msra.mxu0 0.0
    %450 = vmatprep.subr.mxu0 0.0
    %451 = vmatpush1.msra.mxu0 0.0
    %452 = vmatprep.subr.mxu0 0.0
    %453 = vmatpush1.msra.mxu0 0.0
    %454 = vmatprep.subr.mxu0 0.0
    %455 = vmatpush1.msra.mxu0 0.0
    %456 = vmatprep.subr.mxu0 0.0
    %457 = vmatpush1.msra.mxu0 0.0
    %458 = vmatprep.subr.mxu0 0.0
    %459 = vmatpush1.msra.mxu0 0.0
    %460 = vmatprep.subr.mxu0 0.0
    %461 = vmatpush1.msra.mxu0 0.0
    %462 = vmatprep.subr.mxu0 0.0
    %463 = vmatpush1.msra.mxu0 0.0
    %464 = vmatprep.subr.mxu0 0.0
    %465 = vmatpush1.msra.mxu0 0.0
    %466 = vmatprep.subr.mxu0 0.0
    %467 = vmatpush1.msra.mxu0 0.0
    %468 = vmatprep.subr.mxu0 0.0
    %469 = vmatpush1.msra.mxu0 0.0
    %470 = vmatprep.mubr.f32.mxu0 0.0
    %471 = vmatmul.mubr.f32.gmra.mrb[0].mxu0 %v194
    %v472 = vpop.f32.mrb[0].mxu0
    %v473 = vadd.f32 %v403, %v472
    %v474 = vpop.f32.mrb[0].mxu0
    %475 = vdwg.mxu0
    %v476 = vmax.f32 %v473, 0.0
    %v477 = vld [vmem:[#allocation7] sm:$0xff]
    %v478 = vld [vmem:[#allocation7 + $0x8] sm:$0xff]
    %v479 = vld [vmem:[#allocation7 + $0x10] sm:$0xff]
    %v480 = vld [vmem:[#allocation7 + $0x18] sm:$0xff]
    %v481 = vld [vmem:[#allocation7 + $0x20] sm:$0xff]
    %v482 = vld [vmem:[#allocation7 + $0x28] sm:$0xff]
    %v483 = vld [vmem:[#allocation7 + $0x30] sm:$0xff]
    %v484 = vld [vmem:[#allocation7 + $0x38] sm:$0xff]
    %v485 = vld [vmem:[#allocation7 + $0x40] sm:$0xff]
    %v486 = vld [vmem:[#allocation7 + $0x48] sm:$0xff]
    %v487 = vld [vmem:[#allocation7 + $0x50] sm:$0xff]
    %v488 = vld [vmem:[#allocation7 + $0x58] sm:$0xff]
    %v489 = vld [vmem:[#allocation7 + $0x60] sm:$0xff]
    %v490 = vld [vmem:[#allocation7 + $0x68] sm:$0xff]
    %v491 = vld [vmem:[#allocation7 + $0x70] sm:$0xff]
    %v492 = vld [vmem:[#allocation7 + $0x78] sm:$0xff]
    %v493 = vld [vmem:[%s4] sm:$0x1]
    %v495 = vlaneseq
    %v496 = vshrl.u32 %v495, 7
    %v497 = vsub.s32 0, %v496
    %v498 = vrot.slane %v493, %v497
    %500 = vmatprep.subr.mxu0 0.0
    %501 = vmatpush1.msra.mxu0 %v477
    %502 = vmatprep.subr.mxu0 0.0
    %503 = vmatpush1.msra.mxu0 %v478
    %504 = vmatprep.subr.mxu0 0.0
    %505 = vmatpush1.msra.mxu0 %v479
    %506 = vmatprep.subr.mxu0 0.0
    %507 = vmatpush1.msra.mxu0 %v480
    %508 = vmatprep.subr.mxu0 0.0
    %509 = vmatpush1.msra.mxu0 %v481
    %510 = vmatprep.subr.mxu0 0.0
    %511 = vmatpush1.msra.mxu0 %v482
    %512 = vmatprep.subr.mxu0 0.0
    %513 = vmatpush1.msra.mxu0 %v483
    %514 = vmatprep.subr.mxu0 0.0
    %515 = vmatpush1.msra.mxu0 %v484
    %516 = vmatprep.subr.mxu0 0.0
    %517 = vmatpush1.msra.mxu0 %v485
    %518 = vmatprep.subr.mxu0 0.0
    %519 = vmatpush1.msra.mxu0 %v486
    %520 = vmatprep.subr.mxu0 0.0
    %521 = vmatpush1.msra.mxu0 %v487
    %522 = vmatprep.subr.mxu0 0.0
    %523 = vmatpush1.msra.mxu0 %v488
    %524 = vmatprep.subr.mxu0 0.0
    %525 = vmatpush1.msra.mxu0 %v489
    %526 = vmatprep.subr.mxu0 0.0
    %527 = vmatpush1.msra.mxu0 %v490
    %528 = vmatprep.subr.mxu0 0.0
    %529 = vmatpush1.msra.mxu0 %v491
    %530 = vmatprep.subr.mxu0 0.0
    %531 = vmatpush1.msra.mxu0 %v492
    %532 = vmatprep.subr.mxu0 0.0
    %533 = vmatpush1.msra.mxu0 0.0
    %534 = vmatprep.subr.mxu0 0.0
    %535 = vmatpush1.msra.mxu0 0.0
    %536 = vmatprep.subr.mxu0 0.0
    %537 = vmatpush1.msra.mxu0 0.0
    %538 = vmatprep.subr.mxu0 0.0
    %539 = vmatpush1.msra.mxu0 0.0
    %540 = vmatprep.subr.mxu0 0.0
    %541 = vmatpush1.msra.mxu0 0.0
    %542 = vmatprep.subr.mxu0 0.0
    %543 = vmatpush1.msra.mxu0 0.0
    %544 = vmatprep.subr.mxu0 0.0
    %545 = vmatpush1.msra.mxu0 0.0
    %546 = vmatprep.subr.mxu0 0.0
    %547 = vmatpush1.msra.mxu0 0.0
    %548 = vmatprep.subr.mxu0 0.0
    %549 = vmatpush1.msra.mxu0 0.0
    %550 = vmatprep.subr.mxu0 0.0
    %551 = vmatpush1.msra.mxu0 0.0
    %552 = vmatprep.subr.mxu0 0.0
    %553 = vmatpush1.msra.mxu0 0.0
    %554 = vmatprep.subr.mxu0 0.0
    %555 = vmatpush1.msra.mxu0 0.0
    %556 = vmatprep.subr.mxu0 0.0
    %557 = vmatpush1.msra.mxu0 0.0
    %558 = vmatprep.subr.mxu0 0.0
    %559 = vmatpush1.msra.mxu0 0.0
    %560 = vmatprep.subr.mxu0 0.0
    %561 = vmatpush1.msra.mxu0 0.0
    %562 = vmatprep.subr.mxu0 0.0
    %563 = vmatpush1.msra.mxu0 0.0
    %564 = vmatprep.mubr.f32.mxu0 0.0
    %565 = vmatmul.mubr.f32.gmra.mrb[0].mxu0 %v476
    %v566 = vpop.f32.mrb[0].mxu0
    %v567 = vadd.f32 %v498, %v566
    %v568 = vpop.f32.mrb[0].mxu0
    %569 = vdwg.mxu0
    %v570 = vmax.f32 %v567, 0.0
    %v571 = vld [vmem:[#allocation8] sm:$0xff]
    %v572 = vld [vmem:[#allocation8 + $0x8] sm:$0xff]
    %v573 = vld [vmem:[#allocation8 + $0x10] sm:$0xff]
    %v574 = vld [vmem:[#allocation8 + $0x18] sm:$0xff]
    %v575 = vld [vmem:[#allocation8 + $0x20] sm:$0xff]
    %v576 = vld [vmem:[#allocation8 + $0x28] sm:$0xff]
    %v577 = vld [vmem:[#allocation8 + $0x30] sm:$0xff]
    %v578 = vld [vmem:[#allocation8 + $0x38] sm:$0xff]
    %v579 = vld [vmem:[#allocation8 + $0x40] sm:$0xff]
    %v580 = vld [vmem:[#allocation8 + $0x48] sm:$0xff]
    %v581 = vld [vmem:[#allocation8 + $0x50] sm:$0xff]
    %v582 = vld [vmem:[#allocation8 + $0x58] sm:$0xff]
    %v583 = vld [vmem:[#allocation8 + $0x60] sm:$0xff]
    %v584 = vld [vmem:[#allocation8 + $0x68] sm:$0xff]
    %v585 = vld [vmem:[#allocation8 + $0x70] sm:$0xff]
    %v586 = vld [vmem:[#allocation8 + $0x78] sm:$0xff]
    %v587 = vld [vmem:[%s6] sm:$0x1]
    %v589 = vlaneseq
    %v590 = vshrl.u32 %v589, 7
    %v591 = vsub.s32 0, %v590
    %v592 = vrot.slane %v587, %v591
    %594 = vmatprep.subr.mxu0 0.0
    %595 = vmatpush1.msra.mxu0 %v571
    %596 = vmatprep.subr.mxu0 0.0
    %597 = vmatpush1.msra.mxu0 %v572
    %598 = vmatprep.subr.mxu0 0.0
    %599 = vmatpush1.msra.mxu0 %v573
    %600 = vmatprep.subr.mxu0 0.0
    %601 = vmatpush1.msra.mxu0 %v574
    %602 = vmatprep.subr.mxu0 0.0
    %603 = vmatpush1.msra.mxu0 %v575
    %604 = vmatprep.subr.mxu0 0.0
    %605 = vmatpush1.msra.mxu0 %v576
    %606 = vmatprep.subr.mxu0 0.0
    %607 = vmatpush1.msra.mxu0 %v577
    %608 = vmatprep.subr.mxu0 0.0
    %609 = vmatpush1.msra.mxu0 %v578
    %610 = vmatprep.subr.mxu0 0.0
    %611 = vmatpush1.msra.mxu0 %v579
    %612 = vmatprep.subr.mxu0 0.0
    %613 = vmatpush1.msra.mxu0 %v580
    %614 = vmatprep.subr.mxu0 0.0
    %615 = vmatpush1.msra.mxu0 %v581
    %616 = vmatprep.subr.mxu0 0.0
    %617 = vmatpush1.msra.mxu0 %v582
    %618 = vmatprep.subr.mxu0 0.0
    %619 = vmatpush1.msra.mxu0 %v583
    %620 = vmatprep.subr.mxu0 0.0
    %621 = vmatpush1.msra.mxu0 %v584
    %622 = vmatprep.subr.mxu0 0.0
    %623 = vmatpush1.msra.mxu0 %v585
    %624 = vmatprep.subr.mxu0 0.0
    %625 = vmatpush1.msra.mxu0 %v586
    %626 = vmatprep.subr.mxu0 0.0
    %627 = vmatpush1.msra.mxu0 0.0
    %628 = vmatprep.subr.mxu0 0.0
    %629 = vmatpush1.msra.mxu0 0.0
    %630 = vmatprep.subr.mxu0 0.0
    %631 = vmatpush1.msra.mxu0 0.0
    %632 = vmatprep.subr.mxu0 0.0
    %633 = vmatpush1.msra.mxu0 0.0
    %634 = vmatprep.subr.mxu0 0.0
    %635 = vmatpush1.msra.mxu0 0.0
    %636 = vmatprep.subr.mxu0 0.0
    %637 = vmatpush1.msra.mxu0 0.0
    %638 = vmatprep.subr.mxu0 0.0
    %639 = vmatpush1.msra.mxu0 0.0
    %640 = vmatprep.subr.mxu0 0.0
    %641 = vmatpush1.msra.mxu0 0.0
    %642 = vmatprep.subr.mxu0 0.0
    %643 = vmatpush1.msra.mxu0 0.0
    %644 = vmatprep.subr.mxu0 0.0
    %645 = vmatpush1.msra.mxu0 0.0
    %646 = vmatprep.subr.mxu0 0.0
    %647 = vmatpush1.msra.mxu0 0.0
    %648 = vmatprep.subr.mxu0 0.0
    %649 = vmatpush1.msra.mxu0 0.0
    %650 = vmatprep.subr.mxu0 0.0
    %651 = vmatpush1.msra.mxu0 0.0
    %652 = vmatprep.subr.mxu0 0.0
    %653 = vmatpush1.msra.mxu0 0.0
    %654 = vmatprep.subr.mxu0 0.0
    %655 = vmatpush1.msra.mxu0 0.0
    %656 = vmatprep.subr.mxu0 0.0
    %657 = vmatpush1.msra.mxu0 0.0
    %658 = vmatprep.mubr.f32.mxu0 0.0
    %659 = vmatmul.mubr.f32.gmra.mrb[0].mxu0 %v570
    %v660 = vpop.f32.mrb[0].mxu0
    %v661 = vadd.f32 %v592, %v660
    %v662 = vpop.f32.mrb[0].mxu0
    %663 = vdwg.mxu0
    %664 = vst [vmem:[#allocation10] sm:$0xff] %v661
    // Predicated region
    $region46: #{encoder_forward.1} parent=1 // pred_check
      _
    $region47: #{encoder_forward.1} parent=1 // pred_check_branch
      %666 = sbr.rel (0) target = $region49
    $region48: #{encoder_forward.1} parent=1 // pred_region
      %s668 = ssub.s32 128, 128
      %669 = vsyncadd [#allocation4], %s668
      %s671 = sshll.u32 [#allocation10], 4
      %s672 = int_to_ptr.vmem [resolvable:$true] %s671
      %674 = dma.vmem_to_hbm [thread:$0]  %s672, 128, %s7, [#allocation4]
    $region49: #{encoder_forward.1} parent=1 // pred_fallthru
      _
    // Predicated region
    $region50: #{encoder_forward.1} parent=1 // pred_check
      _
    $region51: #{encoder_forward.1} parent=1 // pred_check_branch
      %676 = sbr.rel (0) target = $region53
    $region52: #{encoder_forward.1} parent=1 // pred_region
      %677 = dma.done [#allocation4], 128
    $region53: #{encoder_forward.1} parent=1 // pred_fallthru
      _
    %678 = vsyncpa [#allocation3], 1
    %679 = vsyncpa [#allocation6], 1
    %680 = vsyncpa [#allocation9], 1
    %681 = vsyncpa [#allocation4], 1

</llo_original>
